<compile_context>
chip_gen: v6e
topology: v6e:2x2x1
jax: 0.10.0
libtpu: 0.0.40
codegen_flags: <defaults>
</compile_context>

<pallas_src>
import jax
import jax.numpy as jnp
from jax.experimental import pallas as pl
from jax.experimental.pallas import tpu as pltpu

_LANE = 128  # lane (last-dim) granularity of a vreg


def _round_up(v: int, m: int) -> int:
    return (v + m - 1) // m * m


def _cdiv(a: int, b: int) -> int:
    return (a + b - 1) // b


def _sublane_for(dtype) -> int:
    # Sub-32-bit dtypes pack along sublanes: (8,128) f32, (16,128) bf16, (32,128) int8/fp8.
    return {4: 8, 2: 16, 1: 32}.get(jnp.dtype(dtype).itemsize, 8)


def _vmem_capacity_bytes() -> int:
    try:
        cap = getattr(pltpu.get_tpu_info(), "vmem_capacity_bytes", None)
        if cap:
            return int(cap)
    except Exception:
        pass
    return 64 << 20  # conservative: assume the smallest (v7x-sized) VMEM


def _choose_tiles(B: int, M: int, elem_bytes: int, sub: int, target_buf_bytes: int):
    """Pick (tb, tm) tiles for a (B, M) elementwise op.

    tm: whole row M when sub*M*elem fits the per-buffer budget (contiguous DMA streams,
        M grid axis collapses to 1); otherwise the largest 128-multiple that fits.
    tb: whole batch if it fits the budget at the chosen tm; otherwise the largest
        sublane-multiple that fits (edge block masked via cdiv grid).
    """
    if sub * M * elem_bytes <= target_buf_bytes:
        tm = M  # full row; block dim equals the full array dim, so any M is legal
    else:
        tm = max(_LANE, (target_buf_bytes // (sub * elem_bytes)) // _LANE * _LANE)

    tb_cap = max(sub, (target_buf_bytes // (tm * elem_bytes)) // sub * sub)
    tb = B if B <= tb_cap else tb_cap

    # Megacore (v7x has 2 TCs): if the grid would otherwise be 1x1 and there are enough
    # batch rows, split the batch into two tiles so both cores get work.
    if tm == M and _cdiv(B, tb) < 2 and B >= 2 * sub:
        tb = _round_up(_cdiv(B, 2), sub)

    return tb, tm


# ----------------------------------------------------------------------------
# Pallas kernel: the elementwise hot path  out = scale * x - H_ones
# ----------------------------------------------------------------------------
def _direct_poisson_kernel(scale_ref, x_ref, h1_ref, o_ref):
    # scale_ref: (1,) float32 in SMEM (scale = 2 / alpha)
    # x_ref:     (tb, tm) tile of measurements (VMEM)
    # h1_ref:    (1, tm) tile of H_ones, broadcast over the batch sublanes
    # o_ref:     (tb, tm) output tile
    x = x_ref[...].astype(jnp.float32)
    h = h1_ref[...].astype(jnp.float32)
    o_ref[...] = (scale_ref[0] * x - h).astype(o_ref.dtype)


def direct_poisson_forward(x: jax.Array, h_ones: jax.Array, alpha: float) -> jax.Array:
    """Pallas implementation of DirectPoisson.forward.

    x:      (B, M) batch of measurement vectors
    h_ones: (1, M) buffer H @ ones (row sums of H)
    """
    B, M = x.shape
    assert h_ones.shape == (1, M)
    dtype = x.dtype
    elem_bytes = jnp.dtype(dtype).itemsize
    sub = _sublane_for(dtype)

    vmem_cap = _vmem_capacity_bytes()
    # ~8 MiB per buffer on 128-MiB-VMEM parts (v5e/v6e), ~4 MiB on 64-MiB-VMEM v7x.
    target_buf = (8 << 20) if vmem_cap >= (100 << 20) else (4 << 20)
    tb, tm = _choose_tiles(B, M, elem_bytes, sub, target_buf)

    grid_b = _cdiv(B, tb)
    grid_m = _cdiv(M, tm)
    # M outer, batch inner: H_ones block index only changes on the outer axis.
    grid = (grid_m, grid_b)

    # VMEM: double-buffered x + out tiles plus tiny (1, tm) H_ones buffers, 2x headroom,
    # clamped per generation (<=32 MiB on 64-MiB-VMEM v7x, <=64 MiB on v5e/v6e).
    vmem_need = 4 * tb * tm * elem_bytes + 2 * tm * elem_bytes
    vmem_cap_limit = (32 << 20) if vmem_cap <= (64 << 20) else (64 << 20)
    vmem_limit = int(min(max(2 * vmem_need, 16 << 20), vmem_cap_limit))

    scale = jnp.asarray([2.0 / float(alpha)], dtype=jnp.float32)

    return pl.pallas_call(
        _direct_poisson_kernel,
        out_shape=jax.ShapeDtypeStruct((B, M), dtype),
        grid_spec=pltpu.PrefetchScalarGridSpec(
            num_scalar_prefetch=0,
            grid=grid,
            in_specs=[
                # scale lives whole in SMEM (no recompile when alpha changes)
                pl.BlockSpec(memory_space=pltpu.MemorySpace.SMEM),
                # x tile: (tb, tm); grid order is (mi, bi)
                pl.BlockSpec((tb, tm), lambda mi, bi: (bi, mi)),
                # H_ones tile: (1, tm), constant across the inner (batch) axis
                pl.BlockSpec((1, tm), lambda mi, bi: (0, mi)),
            ],
            out_specs=pl.BlockSpec((tb, tm), lambda mi, bi: (bi, mi)),
        ),
        compiler_params=pltpu.CompilerParams(
            dimension_semantics=("parallel", "parallel"),
            vmem_limit_bytes=vmem_limit,
        ),
    )(scale, x, h_ones)


# ----------------------------------------------------------------------------
# Module-equivalent wrapper (parameter setup in plain JAX, hot path in Pallas)
# ----------------------------------------------------------------------------
class DirectPoissonPallas:
    def __init__(self, alpha: float, H: jax.Array):
        # H: (M, N) direct measurement matrix; Linear(H) computes y = x @ H.T
        self.alpha = float(alpha)
        self.M, self.N = H.shape
        # H_ones = meas_op(ones(1, N)) = ones(1, N) @ H.T -> row sums of H, shape (1, M)
        self.H_ones = jnp.sum(H.astype(jnp.float32), axis=1, keepdims=True).T

    def forward(self, x: jax.Array) -> jax.Array:
        return direct_poisson_forward(x, self.H_ones, self.alpha)

    def sigma(self, x: jax.Array) -> jax.Array:
        # simple elementwise scaling; kept in plain JAX (not the requested hot path)
        return 4.0 * x / (self.alpha ** 2)


if __name__ == "__main__":
    key = jax.random.PRNGKey(0)
    k_h, k_x, k_h2, k_x2 = jax.random.split(key, 4)
    alpha = 10.0

    # Case 1: small shapes consistent with the module: image 16x16 -> N = 256, M = 512
    B, M, N = 2, 512, 16 * 16
    H = jax.random.uniform(k_h, (M, N), dtype=jnp.float32)   # measurement matrix
    x = jax.random.uniform(k_x, (B, M), dtype=jnp.float32)   # batch of measurements
    prep = DirectPoissonPallas(alpha, H)
    out = jax.block_until_ready(prep.forward(x))
    ref = 2.0 * x / alpha - jnp.broadcast_to(prep.H_ones, (B, M))
    assert out.shape == (B, M)
    assert jnp.allclose(out, ref, atol=1e-5, rtol=1e-5)

    # Case 2: awkward shapes (docstring example: B=10, M=400, N=32*32) exercising the
    # masked edge blocks (B not a sublane multiple, M not a lane multiple).
    B2, M2, N2 = 10, 400, 32 * 32
    H2 = jax.random.uniform(k_h2, (M2, N2), dtype=jnp.float32)
    x2 = jax.random.uniform(k_x2, (B2, M2), dtype=jnp.float32)
    prep2 = DirectPoissonPallas(1.0, H2)
    out2 = jax.block_until_ready(prep2.forward(x2))
    ref2 = 2.0 * x2 / 1.0 - jnp.broadcast_to(prep2.H_ones, (B2, M2))
    assert out2.shape == (B2, M2)
    assert jnp.allclose(out2, ref2, atol=1e-4, rtol=1e-5)

    print("KERNEL_OK")
</pallas_src>

<mosaic_0001>
module attributes {stable_mosaic.version = 11 : i64} {
  func.func @_direct_poisson_kernel(%arg0: i32, %arg1: i32, %arg2: memref<1xf32, #tpu.memory_space<smem>>, %arg3: memref<2x512xf32, #tpu.memory_space<vmem>>, %arg4: memref<1x512xf32, #tpu.memory_space<vmem>>, %arg5: memref<2x512xf32, #tpu.memory_space<vmem>>) attributes {dimension_semantics = [#tpu.dimension_semantics<parallel>, #tpu.dimension_semantics<parallel>], iteration_bounds = array<i64: 1, 1>, scalar_prefetch = 0 : i64, scratch_operands = 0 : i64, tpu.core_type = #tpu.core_type<tc>, window_params = [{transform_indices = @transform_0, window_bounds = array<i64: 1>}, {transform_indices = @transform_1, window_bounds = array<i64: 2, 512>}, {transform_indices = @transform_2, window_bounds = array<i64: 1, 512>}, {transform_indices = @transform_3, window_bounds = array<i64: 2, 512>}]} {
    %c0 = arith.constant 0 : index
    %c0_0 = arith.constant 0 : index
    %0 = vector.load %arg3[%c0, %c0_0] : memref<2x512xf32, #tpu.memory_space<vmem>>, vector<2x512xf32>
    %c0_1 = arith.constant 0 : index
    %c0_2 = arith.constant 0 : index
    %1 = vector.load %arg4[%c0_1, %c0_2] : memref<1x512xf32, #tpu.memory_space<vmem>>, vector<1x512xf32>
    %c0_3 = arith.constant 0 : index
    %2 = memref.load %arg2[%c0_3] : memref<1xf32, #tpu.memory_space<smem>>
    %3 = vector.broadcast %2 : f32 to vector<2x512xf32>
    %4 = arith.mulf %3, %0 : vector<2x512xf32>
    %5 = vector.broadcast %1 : vector<1x512xf32> to vector<2x512xf32>
    %6 = arith.subf %4, %5 : vector<2x512xf32>
    %c0_4 = arith.constant 0 : index
    %c0_5 = arith.constant 0 : index
    %7 = vector.load %arg5[%c0_4, %c0_5] : memref<2x512xf32, #tpu.memory_space<vmem>>, vector<2x512xf32>
    tpu.vector_store %arg5[%c0_4, %c0_5], %6 {strides = array<i32>} : memref<2x512xf32, #tpu.memory_space<vmem>>, vector<2x512xf32>,
    return
  }
  func.func @transform_0(%arg0: i32, %arg1: i32) -> i32 {
    %c0_i32 = arith.constant 0 : i32
    %c0_i32_0 = arith.constant 0 : i32
    return %c0_i32 : i32
  }
  func.func @transform_1(%arg0: i32, %arg1: i32) -> (i32, i32) {
    %c0_i32 = arith.constant 0 : i32
    return %arg1, %arg0 : i32, i32
  }
  func.func @transform_2(%arg0: i32, %arg1: i32) -> (i32, i32) {
    %c0_i32 = arith.constant 0 : i32
    %c0_i32_0 = arith.constant 0 : i32
    return %c0_i32, %arg0 : i32, i32
  }
  func.func @transform_3(%arg0: i32, %arg1: i32) -> (i32, i32) {
    %c0_i32 = arith.constant 0 : i32
    return %arg1, %arg0 : i32, i32
  }
}

</mosaic_0001>

<llo_original>
// kernel: tpu_custom_call.1
$region0: #{tpu_custom_call.1}
  #allocation0 [shape = 'u32[]', space=smem, size = 0x4, offset = 0x4, fixed_abs, tag = 'smem constant byte address 0x4 - core index']
  #allocation1 [shape = 'u32[144,128]{1,0:T(1,128)}', space=vmem, size = 0x12000, scoped, tag = 'internal scratch']
  #allocation2 [shape = 'f32[1]{0:T(128)S(6)}', space=smem, size = 0x200, scoped, tag = 'scoped memory for tpu_custom_call.1']
  %s0 = inlined_call_operand.<no memory space> [shape: f32[1], index: 0, kind: input, shape index: {}]
  %s1 = inlined_call_operand.hbm [shape: f32[2,512], index: 1, kind: input, shape index: {}]
  %s2 = inlined_call_operand.hbm [shape: f32[1,512], index: 2, kind: input, shape index: {}]
  %s3 = inlined_call_operand.hbm [shape: f32[2,512], index: 3, kind: output, shape index: {}]
  %s4 = sld [smem:[#allocation0]]
  $region30: #{tpu_custom_call.1} parent=0
    _
  %s6 = ssub.s32 1, %s4
  %s7 = scalar_select 0, %s6, %s4
  %8 = sst [smem:[#allocation2]] %s0
  $region1: #{tpu_custom_call.1} parent=0
    #allocation3 [shape = 'u8[4096]{0}', space=vmem, size = 0x1000, scoped, tag = 'input window, operand 1, single buffered']
    #allocation4 [shape = 's32[1]{0}', space=sflag, size = 0x4, scoped, tag = 'scoped memory for tpu_custom_call.1']
    #allocation5 [shape = 's32[1]{0}', space=sflag, size = 0x4, scoped, tag = 'scoped memory for tpu_custom_call.1']
    #allocation6 [shape = 'u8[2048]{0}', space=vmem, size = 0x800, scoped, tag = 'input window, operand 2, single buffered']
    #allocation7 [shape = 's32[1]{0}', space=sflag, size = 0x4, scoped, tag = 'scoped memory for tpu_custom_call.1']
    #allocation8 [shape = 'u8[4096]{0}', space=vmem, size = 0x1000, scoped, tag = 'output window, operand 0, single buffered']
    %9 = vsyncpa [#allocation4], 0
    %10 = vsyncpa [#allocation7], 0
    %11 = vsyncpa [#allocation5], 0
    // Predicated region
    $region2: #{tpu_custom_call.1} parent=1 // pred_check
      _
    $region3: #{tpu_custom_call.1} parent=1 // pred_check_branch
      %13 = sbr.rel (0) target = $region5
    $region4: #{tpu_custom_call.1} parent=1 // pred_region
      _
    $region5: #{tpu_custom_call.1} parent=1 // pred_fallthru
      _
    // Predicated region
    $region6: #{tpu_custom_call.1} parent=1 // pred_check
      _
    $region7: #{tpu_custom_call.1} parent=1 // pred_check_branch
      %15 = sbr.rel (0) target = $region9
    $region8: #{tpu_custom_call.1} parent=1 // pred_region
      %s17 = ssub.s32 128, 128
      %18 = vsyncadd [#allocation4], %s17
      %s20 = sshll.u32 [#allocation3], 4
      %s21 = int_to_ptr.vmem [resolvable:$true] %s20
      %23 = dma.hbm_to_vmem [thread:$0]  %s1, 128, %s21, [#allocation4]
    $region9: #{tpu_custom_call.1} parent=1 // pred_fallthru
      _
    // Predicated region
    $region10: #{tpu_custom_call.1} parent=1 // pred_check
      _
    $region11: #{tpu_custom_call.1} parent=1 // pred_check_branch
      %25 = sbr.rel (0) target = $region13
    $region12: #{tpu_custom_call.1} parent=1 // pred_region
      %s27 = ssub.s32 64, 64
      %28 = vsyncadd [#allocation7], %s27
      %s30 = sshll.u32 [#allocation6], 4
      %s31 = int_to_ptr.vmem [resolvable:$true] %s30
      %33 = dma.hbm_to_vmem [thread:$0]  %s2, 64, %s31, [#allocation7]
    $region13: #{tpu_custom_call.1} parent=1 // pred_fallthru
      _
    // Predicated region
    $region14: #{tpu_custom_call.1} parent=1 // pred_check
      _
    $region15: #{tpu_custom_call.1} parent=1 // pred_check_branch
      %35 = sbr.rel (0) target = $region17
    $region16: #{tpu_custom_call.1} parent=1 // pred_region
      %36 = dma.done [#allocation4], 128
    $region17: #{tpu_custom_call.1} parent=1 // pred_fallthru
      _
    // Predicated region
    $region18: #{tpu_custom_call.1} parent=1 // pred_check
      _
    $region19: #{tpu_custom_call.1} parent=1 // pred_check_branch
      %38 = sbr.rel (0) target = $region21
    $region20: #{tpu_custom_call.1} parent=1 // pred_region
      %39 = dma.done [#allocation7], 64
    $region21: #{tpu_custom_call.1} parent=1 // pred_fallthru
      _
    %v40 = vld [vmem:[#allocation3] sm:$0xff]
    %v41 = vld [vmem:[#allocation6] sm:$0xf]
    %s42 = sld [smem:[#allocation2]]
    %v43 = vstv %s42
    %v44 = vmul.f32 %v43, %v40
    %v46 = vlaneseq
    %v47 = vshrl.u32 %v46, 7
    %v48 = vsub.s32 0, %v47
    %v49 = vrot.slane %v41, %v48
    %v50 = vlaneseq
    %v51 = vshrl.u32 %v50, 7
    %v52 = vsub.s32 1, %v51
    %v53 = vrot.slane %v41, %v52
    %v54 = vlaneseq
    %v55 = vshrl.u32 %v54, 7
    %v56 = vsub.s32 2, %v55
    %v57 = vrot.slane %v41, %v56
    %v58 = vlaneseq
    %v59 = vshrl.u32 %v58, 7
    %v60 = vsub.s32 3, %v59
    %v61 = vrot.slane %v41, %v60
    %v62 = vcombine.low %v49, %v53
    %v63 = vcombine.low %v57, %v61
    %v65 = vunpack.c.l.s4 1983009808
    %v66 = vunpack.c.0.s8 %v65
    %v67 = vlaneseq
    %v68 = vshrl.u32 %v67, 7
    %v69 = vsub.s32 %v66, %v68
    %v70 = vrot.slane %v62, %v69
    %v72 = vunpack.c.l.s4 1983009808
    %v73 = vunpack.c.0.s8 %v72
    %v74 = vlaneseq
    %v75 = vshrl.u32 %v74, 7
    %v76 = vsub.s32 %v73, %v75
    %v77 = vrot.slane %v63, %v76
    %v78 = vcombine.low %v70, %v77
    %v80 = vsub.f32 %v44, %v78
    %81 = vst [vmem:[#allocation8] sm:$0xff] %v80
    // Predicated region
    $region22: #{tpu_custom_call.1} parent=1 // pred_check
      _
    $region23: #{tpu_custom_call.1} parent=1 // pred_check_branch
      %83 = sbr.rel (0) target = $region25
    $region24: #{tpu_custom_call.1} parent=1 // pred_region
      %s85 = ssub.s32 128, 128
      %86 = vsyncadd [#allocation5], %s85
      %s88 = sshll.u32 [#allocation8], 4
      %s89 = int_to_ptr.vmem [resolvable:$true] %s88
      %91 = dma.vmem_to_hbm [thread:$0]  %s89, 128, %s3, [#allocation5]
    $region25: #{tpu_custom_call.1} parent=1 // pred_fallthru
      _
    // Predicated region
    $region26: #{tpu_custom_call.1} parent=1 // pred_check
      _
    $region27: #{tpu_custom_call.1} parent=1 // pred_check_branch
      %93 = sbr.rel (0) target = $region29
    $region28: #{tpu_custom_call.1} parent=1 // pred_region
      %94 = dma.done [#allocation5], 128
    $region29: #{tpu_custom_call.1} parent=1 // pred_fallthru
      _
    %95 = vsyncpa [#allocation4], 1
    %96 = vsyncpa [#allocation7], 1
    %97 = vsyncpa [#allocation5], 1

</llo_original>
